<compile_context>
chip_gen: v6e
topology: v6e:2x2x1
jax: 0.10.0
libtpu: 0.0.40
codegen_flags: <defaults>
</compile_context>

<pallas_src>
import math
from functools import partial

import jax
import jax.numpy as jnp
from jax.experimental import pallas as pl
from jax.experimental.pallas import tpu as pltpu


def _round_up(x, m):
    return (x + m - 1) // m * m


def _cdiv(a, b):
    return (a + b - 1) // b


def _choose_tiling(B, max_batch_tile):
    """Even batch split; tb multiple of 128 whenever the grid has >1 step."""
    b_pad = _round_up(max(int(B), 1), 8)
    num_tiles = _cdiv(b_pad, int(max_batch_tile))
    # v7x has 2 TensorCores: give large batches >=2 grid steps so the
    # "parallel" axis can shard across them (harmless extra step on v5e/v6e).
    if num_tiles == 1 and b_pad >= 2048:
        num_tiles = 2
    if num_tiles == 1:
        tb = b_pad
    else:
        tb = _round_up(_cdiv(b_pad, num_tiles), 128)   # lane-dense logp blocks
        num_tiles = _cdiv(b_pad, tb)
    b_pad = num_tiles * tb
    return b_pad, tb, num_tiles


# ---------------------------------------------------------------------------
# Shared MLP body (runs fully in VMEM; MXU matmuls with f32 accumulation)
# ---------------------------------------------------------------------------
def _mlp_mean(state_ref, w1_ref, b1_ref, w2_ref, b2_ref, w3_ref, b3_ref):
    x = state_ref[...].astype(jnp.float32)                                 # (TB, F)
    h = jnp.dot(x, w1_ref[...], preferred_element_type=jnp.float32) + b1_ref[...]
    h = jnp.maximum(h, 0.0)
    h = jnp.dot(h, w2_ref[...], preferred_element_type=jnp.float32) + b2_ref[...]
    h = jnp.maximum(h, 0.0)
    mean = jnp.dot(h, w3_ref[...], preferred_element_type=jnp.float32) + b3_ref[...]
    return mean                                                            # (TB, A)


# ---------------------------------------------------------------------------
# Kernel 1: sample path (action is None) -> (action, log_prob)
#   eps is standard-normal noise supplied by the wrapper.
# ---------------------------------------------------------------------------
def _actor_sample_kernel(state_ref, w1_ref, b1_ref, w2_ref, b2_ref, w3_ref, b3_ref,
                         eps_ref, action_ref, logp_ref,
                         *, scale: float, log_const_total: float):
    mean = _mlp_mean(state_ref, w1_ref, b1_ref, w2_ref, b2_ref, w3_ref, b3_ref)
    eps = eps_ref[...].astype(jnp.float32)                                 # (TB, A)

    action_ref[...] = mean + scale * eps                                   # reparam sample

    # log N(mean + scale*eps | mean, scale) summed over dims:
    #   -(action-mean)^2/(2 scale^2) = -0.5*eps^2  per dim.
    lp = -0.5 * jnp.sum(eps * eps, axis=-1) + log_const_total              # (TB,)
    logp_ref[...] = lp.reshape(1, logp_ref.shape[-1])                      # lane-dense (1, TB)


# ---------------------------------------------------------------------------
# Kernel 2: given-action path -> log_prob only (the caller's action is
# returned unchanged by the wrapper; no identity copy through HBM)
# ---------------------------------------------------------------------------
def _actor_logp_kernel(state_ref, w1_ref, b1_ref, w2_ref, b2_ref, w3_ref, b3_ref,
                       act_ref, logp_ref,
                       *, inv_two_var: float, log_const_total: float):
    mean = _mlp_mean(state_ref, w1_ref, b1_ref, w2_ref, b2_ref, w3_ref, b3_ref)
    diff = act_ref[...].astype(jnp.float32) - mean
    lp = -inv_two_var * jnp.sum(diff * diff, axis=-1) + log_const_total    # (TB,)
    logp_ref[...] = lp.reshape(1, logp_ref.shape[-1])                      # lane-dense (1, TB)


# ---------------------------------------------------------------------------
# Wrapper
# ---------------------------------------------------------------------------
def actor_forward(params, state, action=None, *, action_std, rng=None,
                  max_batch_tile=4096):
    """Pallas-backed Actor.forward.

    params: dict with w1,b1,w2,b2,w3,b3 (weights as (in, out), biases (1, out))
    state : (B, state_dim + goal_dim), float32 or bfloat16
    action: optional (B, action_dim); if None, sample (needs rng).
    rng   : int seed or jax PRNG key (only needed when sampling).
    Returns (action, log_prob (B,), entropy (B,)).
    """
    if state.dtype not in (jnp.float32, jnp.bfloat16):
        state = state.astype(jnp.float32)
    B, F = state.shape
    A = params["w3"].shape[1]
    scale = float(action_std) ** 2          # torch quirk: Normal(mean, action_var)

    b_pad, tb, num_tiles = _choose_tiling(B, max_batch_tile)
    grid = (num_tiles,)

    state_p = state if b_pad == B else jnp.pad(state, ((0, b_pad - B), (0, 0)))

    weights = (params["w1"], params["b1"], params["w2"], params["b2"],
               params["w3"], params["b3"])
    # Weights/biases: full-array blocks, same block index every step -> VMEM resident.
    weight_specs = [pl.BlockSpec(w.shape, lambda i: (0, 0)) for w in weights]
    row_spec = lambda width: pl.BlockSpec((tb, width), lambda i: (i, 0))
    logp_spec = pl.BlockSpec((1, tb), lambda i: (0, i))    # lane-dense log_prob blocks

    cparams = pltpu.CompilerParams(dimension_semantics=("parallel",))

    # log_prob additive constant summed over action dims.
    log_const_total = A * (-math.log(scale) - 0.5 * math.log(2.0 * math.pi))
    # Entropy is a compile-time constant of the fixed-scale Normal.
    ent_per_dim = 0.5 + 0.5 * math.log(2.0 * math.pi) + math.log(scale)
    entropy = jnp.full((B,), ent_per_dim * A, dtype=jnp.float32)

    if action is None:
        assert rng is not None, "need rng (int seed or PRNG key) to sample"
        key = jax.random.PRNGKey(rng) if isinstance(rng, int) else rng
        # Tile-independent, reproducible noise stream.
        eps = jax.random.normal(key, (b_pad, A), dtype=jnp.float32)

        action_out, logp = pl.pallas_call(
            partial(_actor_sample_kernel, scale=scale,
                    log_const_total=log_const_total),
            out_shape=(jax.ShapeDtypeStruct((b_pad, A), jnp.float32),
                       jax.ShapeDtypeStruct((1, b_pad), jnp.float32)),
            grid_spec=pltpu.PrefetchScalarGridSpec(
                num_scalar_prefetch=0, grid=grid,
                in_specs=[row_spec(F), *weight_specs, row_spec(A)],
                out_specs=(row_spec(A), logp_spec)),
            compiler_params=cparams,
        )(state_p, *weights, eps)
        return action_out[:B], logp[0, :B], entropy

    else:
        if action.dtype not in (jnp.float32, jnp.bfloat16):
            action_k = action.astype(jnp.float32)
        else:
            action_k = action
        action_p = (action_k if b_pad == B
                    else jnp.pad(action_k, ((0, b_pad - B), (0, 0))))

        logp = pl.pallas_call(
            partial(_actor_logp_kernel,
                    inv_two_var=1.0 / (2.0 * scale * scale),
                    log_const_total=log_const_total),
            out_shape=jax.ShapeDtypeStruct((1, b_pad), jnp.float32),
            grid_spec=pltpu.PrefetchScalarGridSpec(
                num_scalar_prefetch=0, grid=grid,
                in_specs=[row_spec(F), *weight_specs, row_spec(A)],
                out_specs=logp_spec),
            compiler_params=cparams,
        )(state_p, *weights, action_p)
        # The caller's action is returned unchanged (as in the torch module).
        return action, logp[0, :B], entropy


# ---------------------------------------------------------------------------
# Deterministic parameter init (stands in for init_orthogonal_weights)
# ---------------------------------------------------------------------------
def init_params(key, in_dim, hidden_dims, action_dim, init_scaling=1.0):
    dims = [in_dim] + list(hidden_dims) + [action_dim]
    params = {}
    ortho = jax.nn.initializers.orthogonal(scale=init_scaling)
    keys = jax.random.split(key, len(dims) - 1)
    for i, (d_in, d_out) in enumerate(zip(dims[:-1], dims[1:]), start=1):
        params[f"w{i}"] = ortho(keys[i - 1], (d_in, d_out), jnp.float32)
        params[f"b{i}"] = jnp.zeros((1, d_out), jnp.float32)
    return params


# ---------------------------------------------------------------------------
# Pure-JAX reference (given-action path is deterministic)
# ---------------------------------------------------------------------------
def actor_forward_ref(params, state, action, *, action_std):
    scale = float(action_std) ** 2
    x = state.astype(jnp.float32)
    h = jnp.maximum(x @ params["w1"] + params["b1"], 0.0)
    h = jnp.maximum(h @ params["w2"] + params["b2"], 0.0)
    mean = h @ params["w3"] + params["b3"]
    logp = (-((action - mean) ** 2) / (2.0 * scale * scale)
            - math.log(scale) - 0.5 * math.log(2.0 * math.pi)).sum(-1)
    ent = jnp.full((state.shape[0],),
                   (0.5 + 0.5 * math.log(2.0 * math.pi) + math.log(scale))
                   * mean.shape[-1])
    return mean, logp, ent


if __name__ == "__main__":
    # Small synthetic "config"
    state_dim, goal_dim, action_dim = 12, 4, 4
    hidden_dims = (32, 32)
    action_std_init = 0.6
    init_scaling = 1.0

    key = jax.random.PRNGKey(0)
    (k_param, k_state, k_sample, k_action,
     k_state2, k_action2) = jax.random.split(key, 6)

    params = init_params(k_param, state_dim + goal_dim, hidden_dims, action_dim,
                         init_scaling)

    # ---------------- B = 8, single tile ----------------
    B = 8
    state = jax.random.normal(k_state, (B, state_dim + goal_dim), dtype=jnp.float32)

    # Path 1: sample (wrapper-drawn eps, in-kernel reparameterization)
    a_s, lp_s, ent_s = actor_forward(params, state, None,
                                     action_std=action_std_init, rng=k_sample)
    jax.block_until_ready((a_s, lp_s, ent_s))
    assert a_s.shape == (B, action_dim) and lp_s.shape == (B,) and ent_s.shape == (B,)
    assert bool(jnp.all(jnp.isfinite(a_s))) and bool(jnp.all(jnp.isfinite(lp_s)))
    # Consistency: log_prob of the sampled action recomputed in pure JAX must match.
    _, lp_s_ref, _ = actor_forward_ref(params, state, a_s, action_std=action_std_init)
    assert jnp.allclose(lp_s, lp_s_ref, atol=1e-3, rtol=1e-3)

    # Path 2: action provided -> log_prob only in the kernel
    given_action = jax.random.normal(k_action, (B, action_dim), dtype=jnp.float32)
    a_g, lp_g, ent_g = actor_forward(params, state, given_action,
                                     action_std=action_std_init)
    jax.block_until_ready((a_g, lp_g, ent_g))

    _, lp_ref, ent_ref = actor_forward_ref(params, state, given_action,
                                           action_std=action_std_init)
    assert jnp.allclose(a_g, given_action)
    assert jnp.allclose(lp_g, lp_ref, atol=1e-3, rtol=1e-4)
    assert jnp.allclose(ent_g, ent_ref, atol=1e-5, rtol=1e-5)

    # ---------------- B = 300, max_batch_tile=128: multi-tile grid + padding --
    B2 = 300
    state2 = jax.random.normal(k_state2, (B2, state_dim + goal_dim), dtype=jnp.float32)
    action2 = jax.random.normal(k_action2, (B2, action_dim), dtype=jnp.float32)
    a2, lp2, ent2 = actor_forward(params, state2, action2,
                                  action_std=action_std_init, max_batch_tile=128)
    jax.block_until_ready((a2, lp2, ent2))
    _, lp2_ref, ent2_ref = actor_forward_ref(params, state2, action2,
                                             action_std=action_std_init)
    assert jnp.allclose(lp2, lp2_ref, atol=1e-3, rtol=1e-4)
    assert jnp.allclose(ent2, ent2_ref, atol=1e-5, rtol=1e-5)

    a2s, lp2s, _ = actor_forward(params, state2, None,
                                 action_std=action_std_init, rng=7,
                                 max_batch_tile=128)
    jax.block_until_ready((a2s, lp2s))
    _, lp2s_ref, _ = actor_forward_ref(params, state2, a2s, action_std=action_std_init)
    assert jnp.allclose(lp2s, lp2s_ref, atol=1e-3, rtol=1e-3)

    # ---------------- bf16 state input (halves the dominant HBM stream) ------
    state_bf16 = state2.astype(jnp.bfloat16)
    a3, lp3, _ = actor_forward(params, state_bf16, action2,
                               action_std=action_std_init, max_batch_tile=128)
    jax.block_until_ready((a3, lp3))
    _, lp3_ref, _ = actor_forward_ref(params, state_bf16.astype(jnp.float32),
                                      action2, action_std=action_std_init)
    assert jnp.allclose(lp3, lp3_ref, atol=1e-2, rtol=1e-2)

    print("KERNEL_OK")
</pallas_src>

<mosaic_0001>
module attributes {stable_mosaic.version = 11 : i64} {
  func.func @_actor_sample_kernel(%arg0: i32, %arg1: memref<8x16xf32, #tpu.memory_space<vmem>>, %arg2: memref<16x32xf32, #tpu.memory_space<vmem>>, %arg3: memref<1x32xf32, #tpu.memory_space<vmem>>, %arg4: memref<32x32xf32, #tpu.memory_space<vmem>>, %arg5: memref<1x32xf32, #tpu.memory_space<vmem>>, %arg6: memref<32x4xf32, #tpu.memory_space<vmem>>, %arg7: memref<1x4xf32, #tpu.memory_space<vmem>>, %arg8: memref<8x4xf32, #tpu.memory_space<vmem>>, %arg9: memref<8x4xf32, #tpu.memory_space<vmem>>, %arg10: memref<1x8xf32, #tpu.memory_space<vmem>>) attributes {dimension_semantics = [#tpu.dimension_semantics<parallel>], iteration_bounds = array<i64: 1>, scalar_prefetch = 0 : i64, scratch_operands = 0 : i64, tpu.core_type = #tpu.core_type<tc>, window_params = [{transform_indices = @transform_0, window_bounds = array<i64: 8, 16>}, {pipeline_mode = #tpu.pipeline_mode<synchronous>, transform_indices = @transform_1, window_bounds = array<i64: 16, 32>}, {pipeline_mode = #tpu.pipeline_mode<synchronous>, transform_indices = @transform_2, window_bounds = array<i64: 1, 32>}, {pipeline_mode = #tpu.pipeline_mode<synchronous>, transform_indices = @transform_3, window_bounds = array<i64: 32, 32>}, {pipeline_mode = #tpu.pipeline_mode<synchronous>, transform_indices = @transform_4, window_bounds = array<i64: 1, 32>}, {pipeline_mode = #tpu.pipeline_mode<synchronous>, transform_indices = @transform_5, window_bounds = array<i64: 32, 4>}, {pipeline_mode = #tpu.pipeline_mode<synchronous>, transform_indices = @transform_6, window_bounds = array<i64: 1, 4>}, {transform_indices = @transform_7, window_bounds = array<i64: 8, 4>}, {transform_indices = @transform_8, window_bounds = array<i64: 8, 4>}, {transform_indices = @transform_9, window_bounds = array<i64: 1, 8>}]} {
    %c0 = arith.constant 0 : index
    %c0_0 = arith.constant 0 : index
    %0 = vector.load %arg1[%c0, %c0_0] : memref<8x16xf32, #tpu.memory_space<vmem>>, vector<8x16xf32>
    %c0_1 = arith.constant 0 : index
    %c0_2 = arith.constant 0 : index
    %1 = vector.load %arg2[%c0_1, %c0_2] : memref<16x32xf32, #tpu.memory_space<vmem>>, vector<16x32xf32>
    %cst = arith.constant dense<0.000000e+00> : vector<8x32xf32>
    %2 = tpu.matmul %0, %1, %cst {dimension_numbers = #tpu.dot_dimension_numbers<[1], [0], [0], [1], [0, 0, 1, 1], [], []>} : vector<8x16xf32>, vector<16x32xf32>, vector<8x32xf32> -> vector<8x32xf32>
    %c0_3 = arith.constant 0 : index
    %c0_4 = arith.constant 0 : index
    %3 = vector.load %arg3[%c0_3, %c0_4] : memref<1x32xf32, #tpu.memory_space<vmem>>, vector<1x32xf32>
    %4 = vector.broadcast %3 : vector<1x32xf32> to vector<8x32xf32>
    %5 = arith.addf %2, %4 : vector<8x32xf32>
    %cst_5 = arith.constant 0.000000e+00 : f32
    %6 = vector.broadcast %cst_5 : f32 to vector<8x32xf32>
    %7 = arith.maximumf %5, %6 : vector<8x32xf32>
    %c0_6 = arith.constant 0 : index
    %c0_7 = arith.constant 0 : index
    %8 = vector.load %arg4[%c0_6, %c0_7] : memref<32x32xf32, #tpu.memory_space<vmem>>, vector<32x32xf32>
    %cst_8 = arith.constant dense<0.000000e+00> : vector<8x32xf32>
    %9 = tpu.matmul %7, %8, %cst_8 {dimension_numbers = #tpu.dot_dimension_numbers<[1], [0], [0], [1], [0, 0, 1, 1], [], []>} : vector<8x32xf32>, vector<32x32xf32>, vector<8x32xf32> -> vector<8x32xf32>
    %c0_9 = arith.constant 0 : index
    %c0_10 = arith.constant 0 : index
    %10 = vector.load %arg5[%c0_9, %c0_10] : memref<1x32xf32, #tpu.memory_space<vmem>>, vector<1x32xf32>
    %11 = vector.broadcast %10 : vector<1x32xf32> to vector<8x32xf32>
    %12 = arith.addf %9, %11 : vector<8x32xf32>
    %cst_11 = arith.constant 0.000000e+00 : f32
    %13 = vector.broadcast %cst_11 : f32 to vector<8x32xf32>
    %14 = arith.maximumf %12, %13 : vector<8x32xf32>
    %c0_12 = arith.constant 0 : index
    %c0_13 = arith.constant 0 : index
    %15 = vector.load %arg6[%c0_12, %c0_13] : memref<32x4xf32, #tpu.memory_space<vmem>>, vector<32x4xf32>
    %cst_14 = arith.constant dense<0.000000e+00> : vector<8x4xf32>
    %16 = tpu.matmul %14, %15, %cst_14 {dimension_numbers = #tpu.dot_dimension_numbers<[1], [0], [0], [1], [0, 0, 1, 1], [], []>} : vector<8x32xf32>, vector<32x4xf32>, vector<8x4xf32> -> vector<8x4xf32>
    %c0_15 = arith.constant 0 : index
    %c0_16 = arith.constant 0 : index
    %17 = vector.load %arg7[%c0_15, %c0_16] : memref<1x4xf32, #tpu.memory_space<vmem>>, vector<1x4xf32>
    %18 = vector.broadcast %17 : vector<1x4xf32> to vector<8x4xf32>
    %19 = arith.addf %16, %18 : vector<8x4xf32>
    %c0_17 = arith.constant 0 : index
    %c0_18 = arith.constant 0 : index
    %20 = vector.load %arg8[%c0_17, %c0_18] : memref<8x4xf32, #tpu.memory_space<vmem>>, vector<8x4xf32>
    %cst_19 = arith.constant 3.600000e-01 : f32
    %21 = vector.broadcast %cst_19 : f32 to vector<8x4xf32>
    %22 = arith.mulf %21, %20 : vector<8x4xf32>
    %23 = arith.addf %19, %22 : vector<8x4xf32>
    %c0_20 = arith.constant 0 : index
    %c0_21 = arith.constant 0 : index
    %24 = vector.load %arg9[%c0_20, %c0_21] : memref<8x4xf32, #tpu.memory_space<vmem>>, vector<8x4xf32>
    tpu.vector_store %arg9[%c0_20, %c0_21], %23 {strides = array<i32>} : memref<8x4xf32, #tpu.memory_space<vmem>>, vector<8x4xf32>,
    %25 = arith.mulf %20, %20 : vector<8x4xf32>
    %cst_22 = arith.constant dense<0.000000e+00> : vector<8xf32>
    %26 = vector.multi_reduction <add>, %25, %cst_22 [1] : vector<8x4xf32> to vector<8xf32>
    %cst_23 = arith.constant -5.000000e-01 : f32
    %27 = vector.broadcast %cst_23 : f32 to vector<8xf32>
    %28 = arith.mulf %27, %26 : vector<8xf32>
    %cst_24 = arith.constant 0.410850853 : f32
    %29 = vector.broadcast %cst_24 : f32 to vector<8xf32>
    %30 = arith.addf %28, %29 : vector<8xf32>
    %31 = vector.shape_cast %30 : vector<8xf32> to vector<1x8xf32>
    %c0_25 = arith.constant 0 : index
    %c0_26 = arith.constant 0 : index
    %32 = vector.load %arg10[%c0_25, %c0_26] : memref<1x8xf32, #tpu.memory_space<vmem>>, vector<1x8xf32>
    tpu.vector_store %arg10[%c0_25, %c0_26], %31 {strides = array<i32>} : memref<1x8xf32, #tpu.memory_space<vmem>>, vector<1x8xf32>,
    return
  }
  func.func @transform_0(%arg0: i32) -> (i32, i32) {
    %c0_i32 = arith.constant 0 : i32
    %c0_i32_0 = arith.constant 0 : i32
    return %arg0, %c0_i32 : i32, i32
  }
  func.func @transform_1(%arg0: i32) -> (i32, i32) {
    %c0_i32 = arith.constant 0 : i32
    %c0_i32_0 = arith.constant 0 : i32
    %c0_i32_1 = arith.constant 0 : i32
    return %c0_i32, %c0_i32_0 : i32, i32
  }
  func.func @transform_2(%arg0: i32) -> (i32, i32) {
    %c0_i32 = arith.constant 0 : i32
    %c0_i32_0 = arith.constant 0 : i32
    %c0_i32_1 = arith.constant 0 : i32
    return %c0_i32, %c0_i32_0 : i32, i32
  }
  func.func @transform_3(%arg0: i32) -> (i32, i32) {
    %c0_i32 = arith.constant 0 : i32
    %c0_i32_0 = arith.constant 0 : i32
    %c0_i32_1 = arith.constant 0 : i32
    return %c0_i32, %c0_i32_0 : i32, i32
  }
  func.func @transform_4(%arg0: i32) -> (i32, i32) {
    %c0_i32 = arith.constant 0 : i32
    %c0_i32_0 = arith.constant 0 : i32
    %c0_i32_1 = arith.constant 0 : i32
    return %c0_i32, %c0_i32_0 : i32, i32
  }
  func.func @transform_5(%arg0: i32) -> (i32, i32) {
    %c0_i32 = arith.constant 0 : i32
    %c0_i32_0 = arith.constant 0 : i32
    %c0_i32_1 = arith.constant 0 : i32
    return %c0_i32, %c0_i32_0 : i32, i32
  }
  func.func @transform_6(%arg0: i32) -> (i32, i32) {
    %c0_i32 = arith.constant 0 : i32
    %c0_i32_0 = arith.constant 0 : i32
    %c0_i32_1 = arith.constant 0 : i32
    return %c0_i32, %c0_i32_0 : i32, i32
  }
  func.func @transform_7(%arg0: i32) -> (i32, i32) {
    %c0_i32 = arith.constant 0 : i32
    %c0_i32_0 = arith.constant 0 : i32
    return %arg0, %c0_i32 : i32, i32
  }
  func.func @transform_8(%arg0: i32) -> (i32, i32) {
    %c0_i32 = arith.constant 0 : i32
    %c0_i32_0 = arith.constant 0 : i32
    return %arg0, %c0_i32 : i32, i32
  }
  func.func @transform_9(%arg0: i32) -> (i32, i32) {
    %c0_i32 = arith.constant 0 : i32
    %c0_i32_0 = arith.constant 0 : i32
    return %c0_i32, %arg0 : i32, i32
  }
}

</mosaic_0001>

<llo_original>
// kernel: tpu_custom_call.1
$region0: #{tpu_custom_call.1}
  #allocation0 [shape = 'u32[]', space=smem, size = 0x4, offset = 0x4, fixed_abs, tag = 'smem constant byte address 0x4 - core index']
  #allocation1 [shape = 'u32[144,128]{1,0:T(1,128)}', space=vmem, size = 0x12000, scoped, tag = 'internal scratch']
  %s0 = inlined_call_operand.hbm [shape: f32[8,16], index: 0, kind: input, shape index: {}]
  %s1 = inlined_call_operand.vmem [shape: f32[16,32], index: 1, kind: input, shape index: {}]
  %s2 = inlined_call_operand.vmem [shape: f32[1,32], index: 2, kind: input, shape index: {}]
  %s3 = inlined_call_operand.vmem [shape: f32[32,32], index: 3, kind: input, shape index: {}]
  %s4 = inlined_call_operand.hbm [shape: f32[1,32], index: 4, kind: input, shape index: {}]
  %s5 = inlined_call_operand.vmem [shape: f32[32,4], index: 5, kind: input, shape index: {}]
  %s6 = inlined_call_operand.vmem [shape: f32[1,4], index: 6, kind: input, shape index: {}]
  %s7 = inlined_call_operand.vmem [shape: f32[8,4], index: 7, kind: input, shape index: {}]
  %s8 = inlined_call_operand.vmem [shape: f32[8,4], index: 8, kind: output, shape index: {0}]
  %s9 = inlined_call_operand.hbm [shape: f32[1,8], index: 9, kind: output, shape index: {1}]
  %10 = xla_tuple %s8, %s9
  %s11 = sld [smem:[#allocation0]]
  $region58: #{tpu_custom_call.1} parent=0
    _
  %s13 = ssub.s32 1, %s11
  %s14 = scalar_select 0, %s13, %s11
  $region1: #{tpu_custom_call.1} parent=0
    #allocation2 [shape = 'u8[4096]{0}', space=vmem, size = 0x1000, scoped, tag = 'input window, operand 0, single buffered']
    #allocation3 [shape = 's32[1]{0}', space=sflag, size = 0x4, scoped, tag = 'scoped memory for tpu_custom_call.1']
    #allocation4 [shape = 's32[1]{0}', space=sflag, size = 0x4, scoped, tag = 'scoped memory for tpu_custom_call.1']
    #allocation5 [shape = 'u8[512]{0}', space=vmem, size = 0x400, scoped, tag = 'input window, operand 4, single buffered']
    #allocation6 [shape = 's32[1]{0}', space=sflag, size = 0x4, scoped, tag = 'scoped memory for tpu_custom_call.1']
    #allocation7 [shape = 'u8[512]{0}', space=vmem, size = 0x400, scoped, tag = 'output window, operand 1, single buffered']
    %15 = vsyncpa [#allocation3], 0
    %16 = vsyncpa [#allocation6], 0
    %17 = vsyncpa [#allocation4], 0
    // Predicated region
    $region2: #{tpu_custom_call.1} parent=1 // pred_check
      _
    $region3: #{tpu_custom_call.1} parent=1 // pred_check_branch
      %19 = sbr.rel (0) target = $region5
    $region4: #{tpu_custom_call.1} parent=1 // pred_region
      %s21 = ssub.s32 128, 128
      %22 = vsyncadd [#allocation3], %s21
      %s24 = sshll.u32 [#allocation2], 4
      %s25 = int_to_ptr.vmem [resolvable:$true] %s24
      %27 = dma.hbm_to_vmem [thread:$0]  %s0, 128, %s25, [#allocation3]
    $region5: #{tpu_custom_call.1} parent=1 // pred_fallthru
      _
    // Predicated region
    $region6: #{tpu_custom_call.1} parent=1 // pred_check
      _
    $region7: #{tpu_custom_call.1} parent=1 // pred_check_branch
      %29 = sbr.rel (0) target = $region9
    $region8: #{tpu_custom_call.1} parent=1 // pred_region
      _
    $region9: #{tpu_custom_call.1} parent=1 // pred_fallthru
      _
    // Predicated region
    $region10: #{tpu_custom_call.1} parent=1 // pred_check
      _
    $region11: #{tpu_custom_call.1} parent=1 // pred_check_branch
      %31 = sbr.rel (0) target = $region13
    $region12: #{tpu_custom_call.1} parent=1 // pred_region
      _
    $region13: #{tpu_custom_call.1} parent=1 // pred_fallthru
      _
    // Predicated region
    $region14: #{tpu_custom_call.1} parent=1 // pred_check
      _
    $region15: #{tpu_custom_call.1} parent=1 // pred_check_branch
      %33 = sbr.rel (0) target = $region17
    $region16: #{tpu_custom_call.1} parent=1 // pred_region
      _
    $region17: #{tpu_custom_call.1} parent=1 // pred_fallthru
      _
    // Predicated region
    $region18: #{tpu_custom_call.1} parent=1 // pred_check
      _
    $region19: #{tpu_custom_call.1} parent=1 // pred_check_branch
      %35 = sbr.rel (0) target = $region21
    $region20: #{tpu_custom_call.1} parent=1 // pred_region
      %s37 = ssub.s32 16, 16
      %38 = vsyncadd [#allocation6], %s37
      %s40 = sshll.u32 [#allocation5], 4
      %s41 = int_to_ptr.vmem [resolvable:$true] %s40
      %43 = dma.hbm_to_vmem [thread:$0]  %s4, 16, %s41, [#allocation6]
    $region21: #{tpu_custom_call.1} parent=1 // pred_fallthru
      _
    // Predicated region
    $region22: #{tpu_custom_call.1} parent=1 // pred_check
      _
    $region23: #{tpu_custom_call.1} parent=1 // pred_check_branch
      %45 = sbr.rel (0) target = $region25
    $region24: #{tpu_custom_call.1} parent=1 // pred_region
      _
    $region25: #{tpu_custom_call.1} parent=1 // pred_fallthru
      _
    // Predicated region
    $region26: #{tpu_custom_call.1} parent=1 // pred_check
      _
    $region27: #{tpu_custom_call.1} parent=1 // pred_check_branch
      %47 = sbr.rel (0) target = $region29
    $region28: #{tpu_custom_call.1} parent=1 // pred_region
      _
    $region29: #{tpu_custom_call.1} parent=1 // pred_fallthru
      _
    // Predicated region
    $region30: #{tpu_custom_call.1} parent=1 // pred_check
      _
    $region31: #{tpu_custom_call.1} parent=1 // pred_check_branch
      %49 = sbr.rel (0) target = $region33
    $region32: #{tpu_custom_call.1} parent=1 // pred_region
      _
    $region33: #{tpu_custom_call.1} parent=1 // pred_fallthru
      _
    // Predicated region
    $region34: #{tpu_custom_call.1} parent=1 // pred_check
      _
    $region35: #{tpu_custom_call.1} parent=1 // pred_check_branch
      %51 = sbr.rel (0) target = $region37
    $region36: #{tpu_custom_call.1} parent=1 // pred_region
      %52 = dma.done [#allocation3], 128
    $region37: #{tpu_custom_call.1} parent=1 // pred_fallthru
      _
    // Predicated region
    $region38: #{tpu_custom_call.1} parent=1 // pred_check
      _
    $region39: #{tpu_custom_call.1} parent=1 // pred_check_branch
      %54 = sbr.rel (0) target = $region41
    $region40: #{tpu_custom_call.1} parent=1 // pred_region
      %55 = dma.done [#allocation6], 16
    $region41: #{tpu_custom_call.1} parent=1 // pred_fallthru
      _
    %v56 = vld [vmem:[#allocation2] sm:$0xff]
    %v57 = vld [vmem:[%s1] sm:$0xff]
    %v58 = vld [vmem:[%s1 + $0x8] sm:$0xff]
    %v59 = vld [vmem:[%s2] sm:$0x1]
    %v61 = vlaneseq
    %v62 = vshrl.u32 %v61, 7
    %v63 = vsub.s32 0, %v62
    %v64 = vrot.slane %v59, %v63
    %vm66 = vcmask 130048
    %v68 = vsel %vm66, %v56, 0
    %70 = vmatprep.subr.mxu0 0.0
    %71 = vmatpush1.msra.mxu0 0.0
    %72 = vmatprep.subr.mxu0 0.0
    %73 = vmatpush1.msra.mxu0 0.0
    %74 = vmatprep.subr.mxu0 0.0
    %75 = vmatpush1.msra.mxu0 0.0
    %76 = vmatprep.subr.mxu0 0.0
    %77 = vmatpush1.msra.mxu0 0.0
    %78 = vmatprep.subr.mxu0 0.0
    %79 = vmatpush1.msra.mxu0 0.0
    %80 = vmatprep.subr.mxu0 0.0
    %81 = vmatpush1.msra.mxu0 0.0
    %82 = vmatprep.subr.mxu0 0.0
    %83 = vmatpush1.msra.mxu0 0.0
    %84 = vmatprep.subr.mxu0 0.0
    %85 = vmatpush1.msra.mxu0 0.0
    %86 = vmatprep.subr.mxu0 0.0
    %87 = vmatpush1.msra.mxu0 0.0
    %88 = vmatprep.subr.mxu0 0.0
    %89 = vmatpush1.msra.mxu0 0.0
    %90 = vmatprep.subr.mxu0 0.0
    %91 = vmatpush1.msra.mxu0 0.0
    %92 = vmatprep.subr.mxu0 0.0
    %93 = vmatpush1.msra.mxu0 0.0
    %94 = vmatprep.subr.mxu0 0.0
    %95 = vmatpush1.msra.mxu0 0.0
    %96 = vmatprep.subr.mxu0 0.0
    %97 = vmatpush1.msra.mxu0 0.0
    %98 = vmatprep.subr.mxu0 0.0
    %99 = vmatpush1.msra.mxu0 %v58
    %100 = vmatprep.subr.mxu0 0.0
    %101 = vmatpush1.msra.mxu0 %v57
    %102 = vmatprep.subr.mxu0 0.0
    %103 = vmatpush2.msra.mxu0 0.0
    %104 = vmatprep.subr.mxu0 0.0
    %105 = vmatpush2.msra.mxu0 0.0
    %106 = vmatprep.subr.mxu0 0.0
    %107 = vmatpush2.msra.mxu0 0.0
    %108 = vmatprep.subr.mxu0 0.0
    %109 = vmatpush2.msra.mxu0 0.0
    %110 = vmatprep.subr.mxu0 0.0
    %111 = vmatpush2.msra.mxu0 0.0
    %112 = vmatprep.subr.mxu0 0.0
    %113 = vmatpush2.msra.mxu0 0.0
    %114 = vmatprep.subr.mxu0 0.0
    %115 = vmatpush2.msra.mxu0 0.0
    %116 = vmatprep.subr.mxu0 0.0
    %117 = vmatpush2.msra.mxu0 0.0
    %118 = vmatprep.subr.mxu0 0.0
    %119 = vmatpush2.msra.mxu0 0.0
    %120 = vmatprep.subr.mxu0 0.0
    %121 = vmatpush2.msra.mxu0 0.0
    %122 = vmatprep.subr.mxu0 0.0
    %123 = vmatpush2.msra.mxu0 0.0
    %124 = vmatprep.subr.mxu0 0.0
    %125 = vmatpush2.msra.mxu0 0.0
    %126 = vmatprep.subr.mxu0 0.0
    %127 = vmatpush2.msra.mxu0 0.0
    %128 = vmatprep.subr.mxu0 0.0
    %129 = vmatpush2.msra.mxu0 0.0
    %130 = vmatprep.subr.mxu0 0.0
    %131 = vmatpush2.msra.mxu0 0.0
    %132 = vmatprep.subr.mxu0 0.0
    %133 = vmatpush2.msra.mxu0 0.0
    %134 = vmatprep.mubr.f32.mxu0 0.0
    %135 = vmatmul.mubr.f32.gmra.mxu0 %v68
    %v136 = vpop.f32.mrf.mxu0
    %v137 = vadd.f32 %v64, %v136
    %v138 = vpop.f32.mrf.mxu0
    %139 = vdwg.mxu0
    %v140 = vmax.f32 %v137, 0.0
    %v141 = vld [vmem:[%s3] sm:$0xff]
    %v142 = vld [vmem:[%s3 + $0x8] sm:$0xff]
    %v143 = vld [vmem:[%s3 + $0x10] sm:$0xff]
    %v144 = vld [vmem:[%s3 + $0x18] sm:$0xff]
    %v145 = vld [vmem:[#allocation5] sm:$0x1]
    %v147 = vlaneseq
    %v148 = vshrl.u32 %v147, 7
    %v149 = vsub.s32 0, %v148
    %v150 = vrot.slane %v145, %v149
    %vm152 = vcmask 261120
    %v154 = vsel %vm152, %v140, 0
    %156 = vmatprep.subr.mxu0 0.0
    %157 = vmatpush1.msra.mxu0 0.0
    %158 = vmatprep.subr.mxu0 0.0
    %159 = vmatpush1.msra.mxu0 0.0
    %160 = vmatprep.subr.mxu0 0.0
    %161 = vmatpush1.msra.mxu0 0.0
    %162 = vmatprep.subr.mxu0 0.0
    %163 = vmatpush1.msra.mxu0 0.0
    %164 = vmatprep.subr.mxu0 0.0
    %165 = vmatpush1.msra.mxu0 0.0
    %166 = vmatprep.subr.mxu0 0.0
    %167 = vmatpush1.msra.mxu0 0.0
    %168 = vmatprep.subr.mxu0 0.0
    %169 = vmatpush1.msra.mxu0 0.0
    %170 = vmatprep.subr.mxu0 0.0
    %171 = vmatpush1.msra.mxu0 0.0
    %172 = vmatprep.subr.mxu0 0.0
    %173 = vmatpush1.msra.mxu0 0.0
    %174 = vmatprep.subr.mxu0 0.0
    %175 = vmatpush1.msra.mxu0 0.0
    %176 = vmatprep.subr.mxu0 0.0
    %177 = vmatpush1.msra.mxu0 0.0
    %178 = vmatprep.subr.mxu0 0.0
    %179 = vmatpush1.msra.mxu0 0.0
    %180 = vmatprep.subr.mxu0 0.0
    %181 = vmatpush1.msra.mxu0 %v144
    %182 = vmatprep.subr.mxu0 0.0
    %183 = vmatpush1.msra.mxu0 %v143
    %184 = vmatprep.subr.mxu0 0.0
    %185 = vmatpush1.msra.mxu0 %v142
    %186 = vmatprep.subr.mxu0 0.0
    %187 = vmatpush1.msra.mxu0 %v141
    %188 = vmatprep.subr.mxu0 0.0
    %189 = vmatpush2.msra.mxu0 0.0
    %190 = vmatprep.subr.mxu0 0.0
    %191 = vmatpush2.msra.mxu0 0.0
    %192 = vmatprep.subr.mxu0 0.0
    %193 = vmatpush2.msra.mxu0 0.0
    %194 = vmatprep.subr.mxu0 0.0
    %195 = vmatpush2.msra.mxu0 0.0
    %196 = vmatprep.subr.mxu0 0.0
    %197 = vmatpush2.msra.mxu0 0.0
    %198 = vmatprep.subr.mxu0 0.0
    %199 = vmatpush2.msra.mxu0 0.0
    %200 = vmatprep.subr.mxu0 0.0
    %201 = vmatpush2.msra.mxu0 0.0
    %202 = vmatprep.subr.mxu0 0.0
    %203 = vmatpush2.msra.mxu0 0.0
    %204 = vmatprep.subr.mxu0 0.0
    %205 = vmatpush2.msra.mxu0 0.0
    %206 = vmatprep.subr.mxu0 0.0
    %207 = vmatpush2.msra.mxu0 0.0
    %208 = vmatprep.subr.mxu0 0.0
    %209 = vmatpush2.msra.mxu0 0.0
    %210 = vmatprep.subr.mxu0 0.0
    %211 = vmatpush2.msra.mxu0 0.0
    %212 = vmatprep.subr.mxu0 0.0
    %213 = vmatpush2.msra.mxu0 0.0
    %214 = vmatprep.subr.mxu0 0.0
    %215 = vmatpush2.msra.mxu0 0.0
    %216 = vmatprep.subr.mxu0 0.0
    %217 = vmatpush2.msra.mxu0 0.0
    %218 = vmatprep.subr.mxu0 0.0
    %219 = vmatpush2.msra.mxu0 0.0
    %220 = vmatprep.mubr.f32.mxu0 0.0
    %221 = vmatmul.mubr.f32.gmra.mxu0 %v154
    %v222 = vpop.f32.mrf.mxu0
    %v223 = vadd.f32 %v150, %v222
    %v224 = vpop.f32.mrf.mxu0
    %225 = vdwg.mxu0
    %v226 = vmax.f32 %v223, 0.0
    %v227 = vld [vmem:[%s5] sm:$0xff]
    %v228 = vld [vmem:[%s5 + $0x8] sm:$0xff]
    %v229 = vld [vmem:[%s5 + $0x10] sm:$0xff]
    %v230 = vld [vmem:[%s5 + $0x18] sm:$0xff]
    %v231 = vld [vmem:[%s6] sm:$0x1]
    %v233 = vlaneseq
    %v234 = vshrl.u32 %v233, 7
    %v235 = vsub.s32 0, %v234
    %v236 = vrot.slane %v231, %v235
    %v239 = vsel %vm152, %v226, 0
    %241 = vmatprep.subr.mxu0 0.0
    %242 = vmatpush1.msra.mxu0 0.0
    %243 = vmatprep.subr.mxu0 0.0
    %244 = vmatpush1.msra.mxu0 0.0
    %245 = vmatprep.subr.mxu0 0.0
    %246 = vmatpush1.msra.mxu0 0.0
    %247 = vmatprep.subr.mxu0 0.0
    %248 = vmatpush1.msra.mxu0 0.0
    %249 = vmatprep.subr.mxu0 0.0
    %250 = vmatpush1.msra.mxu0 0.0
    %251 = vmatprep.subr.mxu0 0.0
    %252 = vmatpush1.msra.mxu0 0.0
    %253 = vmatprep.subr.mxu0 0.0
    %254 = vmatpush1.msra.mxu0 0.0
    %255 = vmatprep.subr.mxu0 0.0
    %256 = vmatpush1.msra.mxu0 0.0
    %257 = vmatprep.subr.mxu0 0.0
    %258 = vmatpush1.msra.mxu0 0.0
    %259 = vmatprep.subr.mxu0 0.0
    %260 = vmatpush1.msra.mxu0 0.0
    %261 = vmatprep.subr.mxu0 0.0
    %262 = vmatpush1.msra.mxu0 0.0
    %263 = vmatprep.subr.mxu0 0.0
    %264 = vmatpush1.msra.mxu0 0.0
    %265 = vmatprep.subr.mxu0 0.0
    %266 = vmatpush1.msra.mxu0 %v230
    %267 = vmatprep.subr.mxu0 0.0
    %268 = vmatpush1.msra.mxu0 %v229
    %269 = vmatprep.subr.mxu0 0.0
    %270 = vmatpush1.msra.mxu0 %v228
    %271 = vmatprep.subr.mxu0 0.0
    %272 = vmatpush1.msra.mxu0 %v227
    %273 = vmatprep.subr.mxu0 0.0
    %274 = vmatpush2.msra.mxu0 0.0
    %275 = vmatprep.subr.mxu0 0.0
    %276 = vmatpush2.msra.mxu0 0.0
    %277 = vmatprep.subr.mxu0 0.0
    %278 = vmatpush2.msra.mxu0 0.0
    %279 = vmatprep.subr.mxu0 0.0
    %280 = vmatpush2.msra.mxu0 0.0
    %281 = vmatprep.subr.mxu0 0.0
    %282 = vmatpush2.msra.mxu0 0.0
    %283 = vmatprep.subr.mxu0 0.0
    %284 = vmatpush2.msra.mxu0 0.0
    %285 = vmatprep.subr.mxu0 0.0
    %286 = vmatpush2.msra.mxu0 0.0
    %287 = vmatprep.subr.mxu0 0.0
    %288 = vmatpush2.msra.mxu0 0.0
    %289 = vmatprep.subr.mxu0 0.0
    %290 = vmatpush2.msra.mxu0 0.0
    %291 = vmatprep.subr.mxu0 0.0
    %292 = vmatpush2.msra.mxu0 0.0
    %293 = vmatprep.subr.mxu0 0.0
    %294 = vmatpush2.msra.mxu0 0.0
    %295 = vmatprep.subr.mxu0 0.0
    %296 = vmatpush2.msra.mxu0 0.0
    %297 = vmatprep.subr.mxu0 0.0
    %298 = vmatpush2.msra.mxu0 0.0
    %299 = vmatprep.subr.mxu0 0.0
    %300 = vmatpush2.msra.mxu0 0.0
    %301 = vmatprep.subr.mxu0 0.0
    %302 = vmatpush2.msra.mxu0 0.0
    %303 = vmatprep.subr.mxu0 0.0
    %304 = vmatpush2.msra.mxu0 0.0
    %305 = vmatprep.mubr.f32.mxu0 0.0
    %306 = vmatmul.mubr.f32.gmra.mxu0 %v239
    %v307 = vpop.f32.mrf.mxu0
    %v308 = vadd.f32 %v236, %v307
    %v309 = vpop.f32.mrf.mxu0
    %310 = vdwg.mxu0
    %v311 = vld [vmem:[%s7] sm:$0xff]
    %v312 = vmul.f32 %v311, 0.36
    %v313 = vadd.f32 %v308, %v312
    %vm314 = vcmask 31744
    %315 = vst.msk [vmem:[%s8] sm:$0xff] %vm314, %v313
    %v316 = vmul.f32 %v311, %v311
    %v317 = vsel %vm314, %v316, 0.0
    %318 = vadd.xlane.f32.xlu0 %v317
    %v319 = vpop.xlane.xlu0 %318
    %v320 = vmul.f32 %v319, -0.5
    %v321 = vadd.f32 %v320, 0.41085085
    %v323 = vlaneseq
    %v324 = vand.u32 %v323, 127
    %v325 = vlaneseq
    %v326 = vshrl.u32 %v325, 7
    %v327 = vsub.s32 %v324, %v326
    %v328 = vrot.slane %v321, %v327
    %vm330 = vcmask 57344
    %331 = vst.msk [vmem:[#allocation7] sm:$0x1] %vm330, %v328
    // Predicated region
    $region42: #{tpu_custom_call.1} parent=1 // pred_check
      _
    $region43: #{tpu_custom_call.1} parent=1 // pred_check_branch
      %333 = sbr.rel (0) target = $region45
    $region44: #{tpu_custom_call.1} parent=1 // pred_region
      _
    $region45: #{tpu_custom_call.1} parent=1 // pred_fallthru
      _
    // Predicated region
    $region46: #{tpu_custom_call.1} parent=1 // pred_check
      _
    $region47: #{tpu_custom_call.1} parent=1 // pred_check_branch
      %335 = sbr.rel (0) target = $region49
    $region48: #{tpu_custom_call.1} parent=1 // pred_region
      %s337 = ssub.s32 16, 16
      %338 = vsyncadd [#allocation4], %s337
      %s340 = sshll.u32 [#allocation7], 4
      %s341 = int_to_ptr.vmem [resolvable:$true] %s340
      %343 = dma.vmem_to_hbm [thread:$0]  %s341, 16, %s9, [#allocation4]
    $region49: #{tpu_custom_call.1} parent=1 // pred_fallthru
      _
    // Predicated region
    $region50: #{tpu_custom_call.1} parent=1 // pred_check
      _
    $region51: #{tpu_custom_call.1} parent=1 // pred_check_branch
      %345 = sbr.rel (0) target = $region53
    $region52: #{tpu_custom_call.1} parent=1 // pred_region
      _
    $region53: #{tpu_custom_call.1} parent=1 // pred_fallthru
      _
    // Predicated region
    $region54: #{tpu_custom_call.1} parent=1 // pred_check
      _
    $region55: #{tpu_custom_call.1} parent=1 // pred_check_branch
      %347 = sbr.rel (0) target = $region57
    $region56: #{tpu_custom_call.1} parent=1 // pred_region
      %348 = dma.done [#allocation4], 16
    $region57: #{tpu_custom_call.1} parent=1 // pred_fallthru
      _
    %349 = vsyncpa [#allocation3], 1
    %350 = vsyncpa [#allocation6], 1
    %351 = vsyncpa [#allocation4], 1

</llo_original>
